<compile_context>
chip_gen: v5e
topology: v5e:2x2
jax: 0.10.0
libtpu: 0.0.40
codegen_flags: <defaults>
</compile_context>

<pallas_src>
import functools

import jax
import jax.numpy as jnp
from jax.experimental import pallas as pl
from jax.experimental.pallas import tpu as pltpu

# ----------------------------- configuration -------------------------------
VOCAB = 32
H = 32                    # acoustic-model hidden size
N_MELS = 16
N_SPK = 8
STYLE_DIM = 12
CONTENT_DIM = 12
SEGMENT_SIZE = 8          # in mel frames
UPSAMPLE_RATES = (2, 2)   # upsample_factor = prod = 4
UPSAMPLE_INIT_CH = 32
RES_KERNEL = 3
RES_DILATIONS = (1, 3)
LRELU_SLOPE = 0.1
UPSAMPLE_FACTOR = 1
for _u in UPSAMPLE_RATES:
    UPSAMPLE_FACTOR *= _u


# ------------------------------ small helpers -------------------------------
def _round_up(x, m):
    return ((x + m - 1) // m) * m


def _vmem_limit_bytes():
    """Per-chip VMEM budget: ~48 MiB on v7x (64 MiB phys), ~96 MiB on v5e/v6e."""
    try:
        cap = pltpu.get_tpu_info().vmem_capacity_bytes
    except Exception:
        cap = 64 * 1024 * 1024
    return min(int(cap) * 3 // 4, 100 * 1024 * 1024)


def _cparams(n_axes):
    return pltpu.CompilerParams(
        dimension_semantics=("parallel",) * n_axes,
        vmem_limit_bytes=_vmem_limit_bytes())


def _mm(a_f32, w_bf16):
    """MXU dot: bf16 operands (weights pre-cast in wrapper), f32 accumulation."""
    return jnp.dot(a_f32.astype(jnp.bfloat16), w_bf16,
                   preferred_element_type=jnp.float32)


def _lrelu(v):
    return jnp.where(v > 0, v, LRELU_SLOPE * v)


# ----------------- in-kernel conv building blocks ((T, C) layout) -----------
def _shifted(xb, shift, t):
    """Rows q of result = xb[q + shift], zero-filled halo; only halo rows are
    zeros (no full-slab zero fill)."""
    c = xb.shape[1]
    lo, hi = max(0, -shift), min(t, t - shift)
    if hi <= lo:
        return jnp.zeros((t, c), xb.dtype)
    pieces = []
    if lo > 0:
        pieces.append(jnp.zeros((lo, c), xb.dtype))
    pieces.append(xb[lo + shift:hi + shift, :])
    if hi < t:
        pieces.append(jnp.zeros((t - hi, c), xb.dtype))
    return pieces[0] if len(pieces) == 1 else jnp.concatenate(pieces, axis=0)


def _conv_tc(x, w_mat, b_row, *, K, dil, pad):
    """Stride-1 dilated Conv1d in (T, C) layout as one MXU dot.

    x: (t, cin) f32; w_mat: (K*cin, cout) bf16, rows ordered (k major, cin
    minor); b_row: (1, cout) f32.  'same' padding.  Returns (t, cout) f32.
    """
    t = x.shape[0]
    xb = x.astype(jnp.bfloat16)
    slab = jnp.concatenate([_shifted(xb, k * dil - pad, t) for k in range(K)],
                           axis=1)
    return jnp.dot(slab, w_mat, preferred_element_type=jnp.float32) + b_row


def _tconv_tc(x, w_phases, b_row, taps_list):
    """Polyphase ConvTranspose1d (stride u, kernel 2u, pad u//2) in (T, C).

    x: (t, cin) f32; w_phases: (u, n_taps*cin, cout) bf16; b_row: (1, cout).
    Returns the INTERLEAVED output (t*u, cout) f32 — the interleave is a
    leading-dim reshape done in VMEM (no HBM transpose).
    """
    t = x.shape[0]
    xb = x.astype(jnp.bfloat16)
    phases = []
    for r, taps in enumerate(taps_list):
        slab = jnp.concatenate([_shifted(xb, -m, t) for (_k, m) in taps], axis=1)
        phases.append(jnp.dot(slab, w_phases[r],
                              preferred_element_type=jnp.float32) + b_row)
    u = len(taps_list)
    y = jnp.stack(phases, axis=1)            # (t, u, cout)
    return y.reshape(t * u, y.shape[-1])     # time interleave; lane dim untouched


def _polyphase_plan(u):
    """Per output phase r (t_out = q*u + r): taps (k, m) of a PyTorch
    ConvTranspose1d with kernel 2u, stride u, padding u//2; source is x[q-m]."""
    ku = 2 * u
    p = (ku - u) // 2
    phases = []
    for r in range(u):
        taps = []
        for m in range(-ku, ku + 1):
            k = m * u + r + p
            if 0 <= k < ku:
                taps.append((k, m))
        phases.append(tuple(taps))
    return tuple(phases)


# --------------------------- fused acoustic model ----------------------------
def _make_am_kernel(factor, use_targets):
    def kernel(*refs):
        if use_targets:
            x_ref, pet_ref = refs[0], refs[1]
            ws = refs[2:-1]
        else:
            x_ref, pet_ref = refs[0], None
            ws = refs[1:-1]
        (e1w, e1b, e2w, e2b, pew, peb, pvw, pvb,
         d1w, d1b, d2w, d2b, mw, mb) = ws
        out_ref = refs[-1]

        x = x_ref[...]                                          # (tile_m, H) f32
        # encoder MLP
        h = jnp.maximum(_mm(x, e1w[...]) + e1b[...], 0.0)
        h = jnp.maximum(_mm(h, e2w[...]) + e2b[...], 0.0)
        # pitch / energy heads packed into one 2-wide dot
        pe = _mm(h, pew[...]) + peb[...]                        # (tile_m, 2)
        pe_used = pet_ref[...] if use_targets else pe
        # variance embeddings as rank-1 VPU outer products
        pv = pvw[...]
        h = (h + pe_used[:, 0:1] * pv[0:1, :]
               + pe_used[:, 1:2] * pv[1:2, :] + pvb[...])
        # decoder MLP + mel projection (row-wise: commutes with the repeat)
        d = jnp.maximum(_mm(h, d1w[...]) + d1b[...], 0.0)
        d = jnp.maximum(_mm(d, d2w[...]) + d2b[...], 0.0)
        mel = _mm(d, mw[...]) + mb[...]                         # (tile_m, N_MELS)
        # static-uniform length regulation realised as lane tiling + pe packed
        # into the same slab -> single lane-dense store per tile.
        out_ref[...] = jnp.concatenate([mel] * factor + [pe], axis=1
                                       ).astype(out_ref.dtype)
    return kernel


def prompt_tts_forward(p, inputs_ling, input_lengths, inputs_speaker,
                       inputs_style_embedding, inputs_content_embedding,
                       mel_targets, output_lengths, pitch_targets,
                       energy_targets, alpha):
    del input_lengths, output_lengths, alpha
    # TODO(synk): mask padded positions (input/output lengths) before the
    # encoder / variance predictors like the reference PromptTTS.
    B, T = inputs_ling.shape
    f32, bf16 = jnp.float32, jnp.bfloat16

    tok = jnp.take(p["tok_emb"], inputs_ling, axis=0)            # (B, T, H)
    spk = jnp.take(p["spk_emb"], inputs_speaker, axis=0)         # (B, H)
    # style/content conditioning hoisted out of the kernel: tiny (B, H) op.
    sc = jnp.concatenate([inputs_style_embedding,
                          inputs_content_embedding], axis=-1)    # (B, 24)
    sc_w = jnp.concatenate([p["style_w"], p["content_w"]], axis=0)
    cond = sc @ sc_w + (p["style_b"] + p["content_b"])[None, :]
    x0 = (tok + spk[:, None, :] + cond[:, None, :]).reshape(B * T, H).astype(f32)

    use_targets = pitch_targets is not None and energy_targets is not None

    # TODO(synk): true duration-predictor / MAS length regulator; a static
    # uniform repeat factor is used for length regulation.
    if mel_targets is not None:
        factor = max(int(mel_targets.shape[1]) // T, 1)
    else:
        factor = 2
    t_mel = T * factor
    d_out = factor * N_MELS + 2

    M = B * T
    # No host padding: cdiv grid, ragged tail masked by Pallas.  Keep >= 2
    # grid steps when possible so v7x's two TensorCores both get work.
    tile_m = 512 if M > 512 else max(8, _round_up(pl.cdiv(M, 2), 8))
    grid = (pl.cdiv(M, tile_m),)

    row_map = lambda i: (i, 0)
    w_map = lambda i: (0, 0)

    pe_w = jnp.concatenate([p["pitch_w"], p["energy_w"]], axis=1).astype(bf16)
    pe_b = jnp.concatenate([p["pitch_b"], p["energy_b"]]).reshape(1, 2)
    pv_w = jnp.concatenate([p["pitch_emb_w"], p["energy_emb_w"]], axis=0)    # f32
    pv_b = (p["pitch_emb_b"] + p["energy_emb_b"]).reshape(1, H)

    w_args = [
        p["enc1_w"].astype(bf16), p["enc1_b"].reshape(1, H),
        p["enc2_w"].astype(bf16), p["enc2_b"].reshape(1, H),
        pe_w, pe_b, pv_w, pv_b,
        p["dec1_w"].astype(bf16), p["dec1_b"].reshape(1, H),
        p["dec2_w"].astype(bf16), p["dec2_b"].reshape(1, H),
        p["mel_w"].astype(bf16), p["mel_b"].reshape(1, N_MELS),
    ]
    w_specs = [pl.BlockSpec(a.shape, w_map) for a in w_args]

    in_args = [x0]
    in_specs = [pl.BlockSpec((tile_m, H), row_map)]
    if use_targets:
        pe_t = jnp.stack([pitch_targets, energy_targets],
                         axis=-1).reshape(M, 2).astype(f32)
        in_args.append(pe_t)
        in_specs.append(pl.BlockSpec((tile_m, 2), row_map))
    in_args += w_args
    in_specs += w_specs

    out = pl.pallas_call(
        _make_am_kernel(factor, use_targets),
        out_shape=jax.ShapeDtypeStruct((M, d_out), f32),
        grid=grid,
        in_specs=in_specs,
        out_specs=pl.BlockSpec((tile_m, d_out), row_map),
        compiler_params=_cparams(1),
    )(*in_args)

    # (M, factor*N_MELS) in (m, factor) row-major order == (B, T*factor, N_MELS)
    # time-major mel — no transpose needed downstream.
    dec = out[:, :factor * N_MELS].reshape(B, t_mel, N_MELS)
    pe_pred = out[:, factor * N_MELS:].reshape(B, T, 2)
    return {
        "dec_outputs": dec,                        # (B, T_mel, n_mels)
        "pitch_predictions": pe_pred[..., 0],
        "energy_predictions": pe_pred[..., 1],
    }


# ------------------------------ fused vocoder --------------------------------
def _make_voc_kernel(plans, dilations):
    n_stages = len(plans)

    def kernel(*refs):
        z_ref, o_ref = refs[0], refs[-1]
        it = iter(refs[1:-1])
        pre_w, pre_b = next(it), next(it)
        x = _conv_tc(z_ref[0], pre_w[...], pre_b[...], K=7, dil=1, pad=3)
        for s in range(n_stages):
            up_w, up_b = next(it), next(it)
            x = _tconv_tc(_lrelu(x), up_w[...], up_b[...], plans[s])
            for d in dilations:
                rw, rb = next(it), next(it)
                # TODO(synk): full HiFiGAN MRF (multiple kernel sizes, two
                # convs per ResBlock); one dilated conv per dilation with a
                # fused residual add is implemented.
                x = x + _conv_tc(_lrelu(x), rw[...], rb[...],
                                 K=RES_KERNEL, dil=d,
                                 pad=d * (RES_KERNEL - 1) // 2)
        post_w, post_b = next(it), next(it)
        y = _conv_tc(_lrelu(x), post_w[...], post_b[...], K=7, dil=1, pad=3)
        o_ref[0] = jnp.tanh(y).astype(o_ref.dtype)

    return kernel


def hifigan_forward(p, z_btc):
    """z_btc: (B, T_seg, n_mels) time-major mel (== PyTorch (B, C, T) input
    transposed — kept time-major end to end so no NCL transposes are needed).
    Returns wav (B, 1, T_wav)."""
    B, t0, c_mel = z_btc.shape
    f32, bf16 = jnp.float32, jnp.bfloat16
    n_stages = len(UPSAMPLE_RATES)
    chans = [UPSAMPLE_INIT_CH // (2 ** i) for i in range(n_stages + 1)]
    plans = [_polyphase_plan(u) for u in UPSAMPLE_RATES]

    def conv_mat(w):   # PyTorch Conv1d (Cout, Cin, K) -> (K*Cin, Cout) bf16
        co, ci, k = w.shape
        return jnp.transpose(w, (2, 1, 0)).reshape(k * ci, co).astype(bf16)

    weights, specs = [], []

    def add_w(arr):
        weights.append(arr)
        specs.append(pl.BlockSpec(arr.shape, lambda b, nd=arr.ndim: (0,) * nd))

    add_w(conv_mat(p["pre_w"]))
    add_w(p["pre_b"].reshape(1, chans[0]).astype(f32))
    for i in range(n_stages):
        w_t = p["up_w"][i]                               # (Cin, Cout, 2u)
        mats = [jnp.concatenate([w_t[:, :, k] for (k, _m) in taps], axis=0)
                for taps in plans[i]]
        add_w(jnp.stack(mats, axis=0).astype(bf16))      # (u, n_taps*Cin, Cout)
        add_w(p["up_b"][i].reshape(1, chans[i + 1]).astype(f32))
        for j in range(len(RES_DILATIONS)):
            add_w(conv_mat(p["res_w"][i][j]))
            add_w(p["res_b"][i][j].reshape(1, chans[i + 1]).astype(f32))
    add_w(conv_mat(p["post_w"]))
    add_w(p["post_b"].reshape(1, 1).astype(f32))

    t_out = t0 * UPSAMPLE_FACTOR
    wav_tc = pl.pallas_call(
        _make_voc_kernel(plans, RES_DILATIONS),
        out_shape=jax.ShapeDtypeStruct((B, t_out, 1), f32),
        grid=(B,),
        in_specs=[pl.BlockSpec((1, t0, c_mel), lambda b: (b, 0, 0))] + specs,
        out_specs=pl.BlockSpec((1, t_out, 1), lambda b: (b, 0, 0)),
        compiler_params=_cparams(1),
    )(z_btc, *weights)
    return jnp.transpose(wav_tc, (0, 2, 1))              # (B, 1, T_wav)


# ------------------------------ glue helpers --------------------------------
def get_random_segments(z_btc, lengths, segment_size, key):
    """Random time crops of (B, T, C); start indices match the reference's
    (B, C, T) formulation (deterministic key).
    TODO(synk): if output_lengths exceed the produced T_mel, crops are clamped
    (shifted) rather than erroring, like the previous version."""
    B, _, C = z_btc.shape
    max_start = jnp.maximum(lengths - segment_size, 0)
    r = jax.random.uniform(key, (B,))
    start = jnp.minimum(
        (r * (max_start + 1).astype(jnp.float32)).astype(jnp.int32), max_start)

    def slice_one(zb, s):
        return jax.lax.dynamic_slice(zb, (s, 0), (segment_size, C))

    segs = jax.vmap(slice_one)(z_btc, start)
    return segs, start, segment_size


# ----------------------------- parameter init -------------------------------
def init_params(key):
    keys = list(jax.random.split(key, 64))
    it = iter(keys)

    def nrm(shape, scale=0.1):
        return (scale * jax.random.normal(next(it), shape)).astype(jnp.float32)

    def zb(n):
        return jnp.zeros((n,), jnp.float32)

    c0 = UPSAMPLE_INIT_CH
    p = {
        "tok_emb": nrm((VOCAB, H)),
        "spk_emb": nrm((N_SPK, H)),
        "style_w": nrm((STYLE_DIM, H)), "style_b": zb(H),
        "content_w": nrm((CONTENT_DIM, H)), "content_b": zb(H),
        "enc1_w": nrm((H, H)), "enc1_b": zb(H),
        "enc2_w": nrm((H, H)), "enc2_b": zb(H),
        "pitch_w": nrm((H, 1)), "pitch_b": zb(1),
        "energy_w": nrm((H, 1)), "energy_b": zb(1),
        "pitch_emb_w": nrm((1, H)), "pitch_emb_b": zb(H),
        "energy_emb_w": nrm((1, H)), "energy_emb_b": zb(H),
        "dec1_w": nrm((H, H)), "dec1_b": zb(H),
        "dec2_w": nrm((H, H)), "dec2_b": zb(H),
        "mel_w": nrm((H, N_MELS)), "mel_b": zb(N_MELS),
        # HiFiGAN — PyTorch weight layouts
        "pre_w": nrm((c0, N_MELS, 7)), "pre_b": zb(c0),          # Conv1d (Co,Ci,K)
        "up_w": [], "up_b": [], "res_w": [], "res_b": [],
    }
    cin = c0
    for i, u in enumerate(UPSAMPLE_RATES):
        cout = c0 // (2 ** (i + 1))
        p["up_w"].append(nrm((cin, cout, 2 * u)))   # ConvTranspose1d (Ci,Co,K)
        p["up_b"].append(zb(cout))
        rw, rb = [], []
        for _d in RES_DILATIONS:
            rw.append(nrm((cout, cout, RES_KERNEL)))             # Conv1d (Co,Ci,K)
            rb.append(zb(cout))
        p["res_w"].append(rw)
        p["res_b"].append(rb)
        cin = cout
    p["post_w"] = nrm((1, cin, 7))
    p["post_b"] = zb(1)
    return p


# ----------------------------- top-level forward ----------------------------
def jets_forward(p, inputs_ling, input_lengths, inputs_speaker,
                 inputs_style_embedding, inputs_content_embedding,
                 mel_targets=None, output_lengths=None, pitch_targets=None,
                 energy_targets=None, alpha=1.0, cut_flag=True,
                 segment_key=None):
    outputs = prompt_tts_forward(p, inputs_ling, input_lengths, inputs_speaker,
                                 inputs_style_embedding,
                                 inputs_content_embedding, mel_targets,
                                 output_lengths, pitch_targets,
                                 energy_targets, alpha)
    # dec_outputs is kept time-major (B, T, C); the reference transposes to
    # (B, C, T) before cropping / the vocoder — our vocoder consumes (B, T, C)
    # directly, so crops use the same time starts and no transposes are needed.
    if mel_targets is not None and cut_flag:
        if segment_key is None:
            segment_key = jax.random.PRNGKey(0)
        z_btc, z_start_idxs, segment_size = get_random_segments(
            outputs["dec_outputs"], output_lengths, SEGMENT_SIZE, segment_key)
    else:
        z_btc = outputs["dec_outputs"]
        z_start_idxs = None
        segment_size = SEGMENT_SIZE

    wav = hifigan_forward(p, z_btc)
    outputs["wav_predictions"] = wav
    outputs["z_start_idxs"] = z_start_idxs
    outputs["segment_size"] = segment_size
    return outputs


# --------------------------------- main --------------------------------------
if __name__ == "__main__":
    B, T, T_MEL = 2, 8, 16

    params = init_params(jax.random.PRNGKey(42))

    key = jax.random.PRNGKey(0)
    ks = jax.random.split(key, 8)
    inputs_ling = jax.random.randint(ks[0], (B, T), 0, VOCAB, dtype=jnp.int32)
    input_lengths = jnp.array([8, 6], dtype=jnp.int32)
    inputs_speaker = jax.random.randint(ks[1], (B,), 0, N_SPK, dtype=jnp.int32)
    inputs_style_embedding = jax.random.normal(ks[2], (B, STYLE_DIM), jnp.float32)
    inputs_content_embedding = jax.random.normal(ks[3], (B, CONTENT_DIM), jnp.float32)
    mel_targets = jax.random.normal(ks[4], (B, T_MEL, N_MELS), jnp.float32)
    output_lengths = jnp.array([16, 12], dtype=jnp.int32)
    pitch_targets = jax.random.normal(ks[5], (B, T), jnp.float32)
    energy_targets = jax.random.normal(ks[6], (B, T), jnp.float32)

    outputs = jets_forward(
        params, inputs_ling, input_lengths, inputs_speaker,
        inputs_style_embedding, inputs_content_embedding,
        mel_targets=mel_targets, output_lengths=output_lengths,
        pitch_targets=pitch_targets, energy_targets=energy_targets,
        alpha=1.0, cut_flag=True, segment_key=ks[7])

    wav = jax.block_until_ready(outputs["wav_predictions"])
    dec = jax.block_until_ready(outputs["dec_outputs"])
    starts = jax.block_until_ready(outputs["z_start_idxs"])

    assert dec.shape == (B, T_MEL, N_MELS)
    assert wav.shape == (B, 1, SEGMENT_SIZE * UPSAMPLE_FACTOR)
    assert starts.shape == (B,)
    assert bool(jnp.all(jnp.isfinite(wav)))
    assert bool(jnp.all(jnp.isfinite(dec)))
    print("KERNEL_OK")
</pallas_src>

<mosaic_0001>
module attributes {stable_mosaic.version = 11 : i64} {
  func.func @kernel(%arg0: i32, %arg1: memref<8x32xf32, #tpu.memory_space<vmem>>, %arg2: memref<8x2xf32, #tpu.memory_space<vmem>>, %arg3: memref<32x32xbf16, #tpu.memory_space<vmem>>, %arg4: memref<1x32xf32, #tpu.memory_space<vmem>>, %arg5: memref<32x32xbf16, #tpu.memory_space<vmem>>, %arg6: memref<1x32xf32, #tpu.memory_space<vmem>>, %arg7: memref<32x2xbf16, #tpu.memory_space<vmem>>, %arg8: memref<1x2xf32, #tpu.memory_space<vmem>>, %arg9: memref<2x32xf32, #tpu.memory_space<vmem>>, %arg10: memref<1x32xf32, #tpu.memory_space<vmem>>, %arg11: memref<32x32xbf16, #tpu.memory_space<vmem>>, %arg12: memref<1x32xf32, #tpu.memory_space<vmem>>, %arg13: memref<32x32xbf16, #tpu.memory_space<vmem>>, %arg14: memref<1x32xf32, #tpu.memory_space<vmem>>, %arg15: memref<32x16xbf16, #tpu.memory_space<vmem>>, %arg16: memref<1x16xf32, #tpu.memory_space<vmem>>, %arg17: memref<8x34xf32, #tpu.memory_space<vmem>>) attributes {dimension_semantics = [#tpu.dimension_semantics<parallel>], iteration_bounds = array<i64: 2>, scalar_prefetch = 0 : i64, scratch_operands = 0 : i64, tpu.core_type = #tpu.core_type<tc>, window_params = [{transform_indices = @transform_0, window_bounds = array<i64: 8, 32>}, {transform_indices = @transform_1, window_bounds = array<i64: 8, 2>}, {pipeline_mode = #tpu.pipeline_mode<synchronous>, transform_indices = @transform_2, window_bounds = array<i64: 32, 32>}, {pipeline_mode = #tpu.pipeline_mode<synchronous>, transform_indices = @transform_3, window_bounds = array<i64: 1, 32>}, {pipeline_mode = #tpu.pipeline_mode<synchronous>, transform_indices = @transform_4, window_bounds = array<i64: 32, 32>}, {pipeline_mode = #tpu.pipeline_mode<synchronous>, transform_indices = @transform_5, window_bounds = array<i64: 1, 32>}, {pipeline_mode = #tpu.pipeline_mode<synchronous>, transform_indices = @transform_6, window_bounds = array<i64: 32, 2>}, {pipeline_mode = #tpu.pipeline_mode<synchronous>, transform_indices = @transform_7, window_bounds = array<i64: 1, 2>}, {pipeline_mode = #tpu.pipeline_mode<synchronous>, transform_indices = @transform_8, window_bounds = array<i64: 2, 32>}, {pipeline_mode = #tpu.pipeline_mode<synchronous>, transform_indices = @transform_9, window_bounds = array<i64: 1, 32>}, {pipeline_mode = #tpu.pipeline_mode<synchronous>, transform_indices = @transform_10, window_bounds = array<i64: 32, 32>}, {pipeline_mode = #tpu.pipeline_mode<synchronous>, transform_indices = @transform_11, window_bounds = array<i64: 1, 32>}, {pipeline_mode = #tpu.pipeline_mode<synchronous>, transform_indices = @transform_12, window_bounds = array<i64: 32, 32>}, {pipeline_mode = #tpu.pipeline_mode<synchronous>, transform_indices = @transform_13, window_bounds = array<i64: 1, 32>}, {pipeline_mode = #tpu.pipeline_mode<synchronous>, transform_indices = @transform_14, window_bounds = array<i64: 32, 16>}, {pipeline_mode = #tpu.pipeline_mode<synchronous>, transform_indices = @transform_15, window_bounds = array<i64: 1, 16>}, {transform_indices = @transform_16, window_bounds = array<i64: 8, 34>}]} {
    %c0 = arith.constant 0 : index
    %c0_0 = arith.constant 0 : index
    %0 = vector.load %arg1[%c0, %c0_0] : memref<8x32xf32, #tpu.memory_space<vmem>>, vector<8x32xf32>
    %c0_1 = arith.constant 0 : index
    %c0_2 = arith.constant 0 : index
    %1 = vector.load %arg3[%c0_1, %c0_2] : memref<32x32xbf16, #tpu.memory_space<vmem>>, vector<32x32xbf16>
    %2 = arith.truncf %0 : vector<8x32xf32> to vector<8x32xbf16>
    %cst = arith.constant dense<0.000000e+00> : vector<8x32xf32>
    %3 = tpu.matmul %2, %1, %cst {dimension_numbers = #tpu.dot_dimension_numbers<[1], [0], [0], [1], [0, 0, 1, 1], [], []>} : vector<8x32xbf16>, vector<32x32xbf16>, vector<8x32xf32> -> vector<8x32xf32>
    %c0_3 = arith.constant 0 : index
    %c0_4 = arith.constant 0 : index
    %4 = vector.load %arg4[%c0_3, %c0_4] : memref<1x32xf32, #tpu.memory_space<vmem>>, vector<1x32xf32>
    %5 = vector.broadcast %4 : vector<1x32xf32> to vector<8x32xf32>
    %6 = arith.addf %3, %5 : vector<8x32xf32>
    %cst_5 = arith.constant 0.000000e+00 : f32
    %7 = vector.broadcast %cst_5 : f32 to vector<8x32xf32>
    %8 = arith.maximumf %6, %7 : vector<8x32xf32>
    %c0_6 = arith.constant 0 : index
    %c0_7 = arith.constant 0 : index
    %9 = vector.load %arg5[%c0_6, %c0_7] : memref<32x32xbf16, #tpu.memory_space<vmem>>, vector<32x32xbf16>
    %10 = arith.truncf %8 : vector<8x32xf32> to vector<8x32xbf16>
    %cst_8 = arith.constant dense<0.000000e+00> : vector<8x32xf32>
    %11 = tpu.matmul %10, %9, %cst_8 {dimension_numbers = #tpu.dot_dimension_numbers<[1], [0], [0], [1], [0, 0, 1, 1], [], []>} : vector<8x32xbf16>, vector<32x32xbf16>, vector<8x32xf32> -> vector<8x32xf32>
    %c0_9 = arith.constant 0 : index
    %c0_10 = arith.constant 0 : index
    %12 = vector.load %arg6[%c0_9, %c0_10] : memref<1x32xf32, #tpu.memory_space<vmem>>, vector<1x32xf32>
    %13 = vector.broadcast %12 : vector<1x32xf32> to vector<8x32xf32>
    %14 = arith.addf %11, %13 : vector<8x32xf32>
    %cst_11 = arith.constant 0.000000e+00 : f32
    %15 = vector.broadcast %cst_11 : f32 to vector<8x32xf32>
    %16 = arith.maximumf %14, %15 : vector<8x32xf32>
    %c0_12 = arith.constant 0 : index
    %c0_13 = arith.constant 0 : index
    %17 = vector.load %arg7[%c0_12, %c0_13] : memref<32x2xbf16, #tpu.memory_space<vmem>>, vector<32x2xbf16>
    %18 = arith.truncf %16 : vector<8x32xf32> to vector<8x32xbf16>
    %cst_14 = arith.constant dense<0.000000e+00> : vector<8x2xf32>
    %19 = tpu.matmul %18, %17, %cst_14 {dimension_numbers = #tpu.dot_dimension_numbers<[1], [0], [0], [1], [0, 0, 1, 1], [], []>} : vector<8x32xbf16>, vector<32x2xbf16>, vector<8x2xf32> -> vector<8x2xf32>
    %c0_15 = arith.constant 0 : index
    %c0_16 = arith.constant 0 : index
    %20 = vector.load %arg8[%c0_15, %c0_16] : memref<1x2xf32, #tpu.memory_space<vmem>>, vector<1x2xf32>
    %21 = vector.broadcast %20 : vector<1x2xf32> to vector<8x2xf32>
    %22 = arith.addf %19, %21 : vector<8x2xf32>
    %c0_17 = arith.constant 0 : index
    %c0_18 = arith.constant 0 : index
    %23 = vector.load %arg2[%c0_17, %c0_18] : memref<8x2xf32, #tpu.memory_space<vmem>>, vector<8x2xf32>
    %c0_19 = arith.constant 0 : index
    %c0_20 = arith.constant 0 : index
    %24 = vector.load %arg9[%c0_19, %c0_20] : memref<2x32xf32, #tpu.memory_space<vmem>>, vector<2x32xf32>
    %25 = vector.extract_strided_slice %23 {offsets = [0, 0], sizes = [8, 1], strides = [1, 1]} : vector<8x2xf32> to vector<8x1xf32>
    %26 = vector.extract_strided_slice %24 {offsets = [0, 0], sizes = [1, 32], strides = [1, 1]} : vector<2x32xf32> to vector<1x32xf32>
    %27 = vector.broadcast %25 : vector<8x1xf32> to vector<8x32xf32>
    %28 = vector.broadcast %26 : vector<1x32xf32> to vector<8x32xf32>
    %29 = arith.mulf %27, %28 : vector<8x32xf32>
    %30 = arith.addf %16, %29 : vector<8x32xf32>
    %31 = vector.extract_strided_slice %23 {offsets = [0, 1], sizes = [8, 1], strides = [1, 1]} : vector<8x2xf32> to vector<8x1xf32>
    %32 = vector.extract_strided_slice %24 {offsets = [1, 0], sizes = [1, 32], strides = [1, 1]} : vector<2x32xf32> to vector<1x32xf32>
    %33 = vector.broadcast %31 : vector<8x1xf32> to vector<8x32xf32>
    %34 = vector.broadcast %32 : vector<1x32xf32> to vector<8x32xf32>
    %35 = arith.mulf %33, %34 : vector<8x32xf32>
    %36 = arith.addf %30, %35 : vector<8x32xf32>
    %c0_21 = arith.constant 0 : index
    %c0_22 = arith.constant 0 : index
    %37 = vector.load %arg10[%c0_21, %c0_22] : memref<1x32xf32, #tpu.memory_space<vmem>>, vector<1x32xf32>
    %38 = vector.broadcast %37 : vector<1x32xf32> to vector<8x32xf32>
    %39 = arith.addf %36, %38 : vector<8x32xf32>
    %c0_23 = arith.constant 0 : index
    %c0_24 = arith.constant 0 : index
    %40 = vector.load %arg11[%c0_23, %c0_24] : memref<32x32xbf16, #tpu.memory_space<vmem>>, vector<32x32xbf16>
    %41 = arith.truncf %39 : vector<8x32xf32> to vector<8x32xbf16>
    %cst_25 = arith.constant dense<0.000000e+00> : vector<8x32xf32>
    %42 = tpu.matmul %41, %40, %cst_25 {dimension_numbers = #tpu.dot_dimension_numbers<[1], [0], [0], [1], [0, 0, 1, 1], [], []>} : vector<8x32xbf16>, vector<32x32xbf16>, vector<8x32xf32> -> vector<8x32xf32>
    %c0_26 = arith.constant 0 : index
    %c0_27 = arith.constant 0 : index
    %43 = vector.load %arg12[%c0_26, %c0_27] : memref<1x32xf32, #tpu.memory_space<vmem>>, vector<1x32xf32>
    %44 = vector.broadcast %43 : vector<1x32xf32> to vector<8x32xf32>
    %45 = arith.addf %42, %44 : vector<8x32xf32>
    %cst_28 = arith.constant 0.000000e+00 : f32
    %46 = vector.broadcast %cst_28 : f32 to vector<8x32xf32>
    %47 = arith.maximumf %45, %46 : vector<8x32xf32>
    %c0_29 = arith.constant 0 : index
    %c0_30 = arith.constant 0 : index
    %48 = vector.load %arg13[%c0_29, %c0_30] : memref<32x32xbf16, #tpu.memory_space<vmem>>, vector<32x32xbf16>
    %49 = arith.truncf %47 : vector<8x32xf32> to vector<8x32xbf16>
    %cst_31 = arith.constant dense<0.000000e+00> : vector<8x32xf32>
    %50 = tpu.matmul %49, %48, %cst_31 {dimension_numbers = #tpu.dot_dimension_numbers<[1], [0], [0], [1], [0, 0, 1, 1], [], []>} : vector<8x32xbf16>, vector<32x32xbf16>, vector<8x32xf32> -> vector<8x32xf32>
    %c0_32 = arith.constant 0 : index
    %c0_33 = arith.constant 0 : index
    %51 = vector.load %arg14[%c0_32, %c0_33] : memref<1x32xf32, #tpu.memory_space<vmem>>, vector<1x32xf32>
    %52 = vector.broadcast %51 : vector<1x32xf32> to vector<8x32xf32>
    %53 = arith.addf %50, %52 : vector<8x32xf32>
    %cst_34 = arith.constant 0.000000e+00 : f32
    %54 = vector.broadcast %cst_34 : f32 to vector<8x32xf32>
    %55 = arith.maximumf %53, %54 : vector<8x32xf32>
    %c0_35 = arith.constant 0 : index
    %c0_36 = arith.constant 0 : index
    %56 = vector.load %arg15[%c0_35, %c0_36] : memref<32x16xbf16, #tpu.memory_space<vmem>>, vector<32x16xbf16>
    %57 = arith.truncf %55 : vector<8x32xf32> to vector<8x32xbf16>
    %cst_37 = arith.constant dense<0.000000e+00> : vector<8x16xf32>
    %58 = tpu.matmul %57, %56, %cst_37 {dimension_numbers = #tpu.dot_dimension_numbers<[1], [0], [0], [1], [0, 0, 1, 1], [], []>} : vector<8x32xbf16>, vector<32x16xbf16>, vector<8x16xf32> -> vector<8x16xf32>
    %c0_38 = arith.constant 0 : index
    %c0_39 = arith.constant 0 : index
    %59 = vector.load %arg16[%c0_38, %c0_39] : memref<1x16xf32, #tpu.memory_space<vmem>>, vector<1x16xf32>
    %60 = vector.broadcast %59 : vector<1x16xf32> to vector<8x16xf32>
    %61 = arith.addf %58, %60 : vector<8x16xf32>
    %62 = tpu.concatenate %61, %61, %22 in 1 : vector<8x16xf32>, vector<8x16xf32>, vector<8x2xf32> -> vector<8x34xf32>
    %c0_40 = arith.constant 0 : index
    %c0_41 = arith.constant 0 : index
    %63 = vector.load %arg17[%c0_40, %c0_41] : memref<8x34xf32, #tpu.memory_space<vmem>>, vector<8x34xf32>
    tpu.vector_store %arg17[%c0_40, %c0_41], %62 {strides = array<i32>} : memref<8x34xf32, #tpu.memory_space<vmem>>, vector<8x34xf32>,
    return
  }
  func.func @transform_0(%arg0: i32) -> (i32, i32) {
    %c0_i32 = arith.constant 0 : i32
    %c0_i32_0 = arith.constant 0 : i32
    return %arg0, %c0_i32 : i32, i32
  }
  func.func @transform_1(%arg0: i32) -> (i32, i32) {
    %c0_i32 = arith.constant 0 : i32
    %c0_i32_0 = arith.constant 0 : i32
    return %arg0, %c0_i32 : i32, i32
  }
  func.func @transform_2(%arg0: i32) -> (i32, i32) {
    %c0_i32 = arith.constant 0 : i32
    %c0_i32_0 = arith.constant 0 : i32
    %c0_i32_1 = arith.constant 0 : i32
    return %c0_i32, %c0_i32_0 : i32, i32
  }
  func.func @transform_3(%arg0: i32) -> (i32, i32) {
    %c0_i32 = arith.constant 0 : i32
    %c0_i32_0 = arith.constant 0 : i32
    %c0_i32_1 = arith.constant 0 : i32
    return %c0_i32, %c0_i32_0 : i32, i32
  }
  func.func @transform_4(%arg0: i32) -> (i32, i32) {
    %c0_i32 = arith.constant 0 : i32
    %c0_i32_0 = arith.constant 0 : i32
    %c0_i32_1 = arith.constant 0 : i32
    return %c0_i32, %c0_i32_0 : i32, i32
  }
  func.func @transform_5(%arg0: i32) -> (i32, i32) {
    %c0_i32 = arith.constant 0 : i32
    %c0_i32_0 = arith.constant 0 : i32
    %c0_i32_1 = arith.constant 0 : i32
    return %c0_i32, %c0_i32_0 : i32, i32
  }
  func.func @transform_6(%arg0: i32) -> (i32, i32) {
    %c0_i32 = arith.constant 0 : i32
    %c0_i32_0 = arith.constant 0 : i32
    %c0_i32_1 = arith.constant 0 : i32
    return %c0_i32, %c0_i32_0 : i32, i32
  }
  func.func @transform_7(%arg0: i32) -> (i32, i32) {
    %c0_i32 = arith.constant 0 : i32
    %c0_i32_0 = arith.constant 0 : i32
    %c0_i32_1 = arith.constant 0 : i32
    return %c0_i32, %c0_i32_0 : i32, i32
  }
  func.func @transform_8(%arg0: i32) -> (i32, i32) {
    %c0_i32 = arith.constant 0 : i32
    %c0_i32_0 = arith.constant 0 : i32
    %c0_i32_1 = arith.constant 0 : i32
    return %c0_i32, %c0_i32_0 : i32, i32
  }
  func.func @transform_9(%arg0: i32) -> (i32, i32) {
    %c0_i32 = arith.constant 0 : i32
    %c0_i32_0 = arith.constant 0 : i32
    %c0_i32_1 = arith.constant 0 : i32
    return %c0_i32, %c0_i32_0 : i32, i32
  }
  func.func @transform_10(%arg0: i32) -> (i32, i32) {
    %c0_i32 = arith.constant 0 : i32
    %c0_i32_0 = arith.constant 0 : i32
    %c0_i32_1 = arith.constant 0 : i32
    return %c0_i32, %c0_i32_0 : i32, i32
  }
  func.func @transform_11(%arg0: i32) -> (i32, i32) {
    %c0_i32 = arith.constant 0 : i32
    %c0_i32_0 = arith.constant 0 : i32
    %c0_i32_1 = arith.constant 0 : i32
    return %c0_i32, %c0_i32_0 : i32, i32
  }
  func.func @transform_12(%arg0: i32) -> (i32, i32) {
    %c0_i32 = arith.constant 0 : i32
    %c0_i32_0 = arith.constant 0 : i32
    %c0_i32_1 = arith.constant 0 : i32
    return %c0_i32, %c0_i32_0 : i32, i32
  }
  func.func @transform_13(%arg0: i32) -> (i32, i32) {
    %c0_i32 = arith.constant 0 : i32
    %c0_i32_0 = arith.constant 0 : i32
    %c0_i32_1 = arith.constant 0 : i32
    return %c0_i32, %c0_i32_0 : i32, i32
  }
  func.func @transform_14(%arg0: i32) -> (i32, i32) {
    %c0_i32 = arith.constant 0 : i32
    %c0_i32_0 = arith.constant 0 : i32
    %c0_i32_1 = arith.constant 0 : i32
    return %c0_i32, %c0_i32_0 : i32, i32
  }
  func.func @transform_15(%arg0: i32) -> (i32, i32) {
    %c0_i32 = arith.constant 0 : i32
    %c0_i32_0 = arith.constant 0 : i32
    %c0_i32_1 = arith.constant 0 : i32
    return %c0_i32, %c0_i32_0 : i32, i32
  }
  func.func @transform_16(%arg0: i32) -> (i32, i32) {
    %c0_i32 = arith.constant 0 : i32
    %c0_i32_0 = arith.constant 0 : i32
    return %arg0, %c0_i32 : i32, i32
  }
}

</mosaic_0001>

<llo_original>
// kernel: tpu_custom_call.1
$region0: #{tpu_custom_call.1}
  #allocation0 [shape = 'u32[]', space=smem, size = 0x4, offset = 0x4, fixed_abs, tag = 'smem constant byte address 0x4 - core index']
  #allocation1 [shape = 'u32[72,128]{1,0:T(1,128)}', space=vmem, size = 0x9000, scoped, tag = 'internal scratch']
  %s0 = inlined_call_operand.vmem [shape: f32[16,32], index: 0, kind: input, shape index: {}]
  %s1 = inlined_call_operand.vmem [shape: f32[16,2], index: 1, kind: input, shape index: {}]
  %s2 = inlined_call_operand.vmem [shape: bf16[32,32], index: 2, kind: input, shape index: {}]
  %s3 = inlined_call_operand.vmem [shape: f32[1,32], index: 3, kind: input, shape index: {}]
  %s4 = inlined_call_operand.vmem [shape: bf16[32,32], index: 4, kind: input, shape index: {}]
  %s5 = inlined_call_operand.vmem [shape: f32[1,32], index: 5, kind: input, shape index: {}]
  %s6 = inlined_call_operand.vmem [shape: bf16[32,2], index: 6, kind: input, shape index: {}]
  %s7 = inlined_call_operand.vmem [shape: f32[1,2], index: 7, kind: input, shape index: {}]
  %s8 = inlined_call_operand.vmem [shape: f32[2,32], index: 8, kind: input, shape index: {}]
  %s9 = inlined_call_operand.vmem [shape: f32[1,32], index: 9, kind: input, shape index: {}]
  %s10 = inlined_call_operand.hbm [shape: bf16[32,32], index: 10, kind: input, shape index: {}]
  %s11 = inlined_call_operand.vmem [shape: f32[1,32], index: 11, kind: input, shape index: {}]
  %s12 = inlined_call_operand.hbm [shape: bf16[32,32], index: 12, kind: input, shape index: {}]
  %s13 = inlined_call_operand.vmem [shape: f32[1,32], index: 13, kind: input, shape index: {}]
  %s14 = inlined_call_operand.vmem [shape: bf16[32,16], index: 14, kind: input, shape index: {}]
  %s15 = inlined_call_operand.vmem [shape: f32[1,16], index: 15, kind: input, shape index: {}]
  %s16 = inlined_call_operand.hbm [shape: f32[16,34], index: 16, kind: output, shape index: {}]
  %s17 = sld [smem:[#allocation0]]
  $region105: #{tpu_custom_call.1} parent=0
    _
  %s19 = ssub.s32 1, %s17
  %s20 = scalar_select 0, %s19, %s17
  $region1: #{tpu_custom_call.1} parent=0
    #allocation2 [shape = 'u8[8192]{0}', space=vmem, size = 0x2000, scoped, tag = 'input window, operand 10, single buffered']
    #allocation3 [shape = 's32[2]{0}', space=sflag, size = 0x8, scoped, tag = 'scoped memory for tpu_custom_call.1']
    #allocation4 [shape = 's32[2]{0}', space=sflag, size = 0x8, scoped, tag = 'scoped memory for tpu_custom_call.1']
    #allocation5 [shape = 'u8[8192]{0}', space=vmem, size = 0x2000, scoped, tag = 'input window, operand 12, single buffered']
    #allocation6 [shape = 's32[1]{0}', space=sflag, size = 0x4, scoped, tag = 'scoped memory for tpu_custom_call.1']
    #allocation7 [shape = 'u8[8192]{0}', space=vmem, size = 0x2000, scoped, tag = 'output window, operand 0']
    %21 = vsyncpa [#allocation3], 0
    %22 = vsyncpa [#allocation6], 0
    %23 = vsyncpa [#allocation4], 0
    %s24 = scalar_lea.sflag [#allocation4], 1
    %25 = vsyncpa %s24, 0
    loop: start=0, step=1, limit=4
    $region2: #{tpu_custom_call.1} parent=1 // loop_pre_header
      _
    $region3: #{tpu_custom_call.1} parent=1 // loop_header
      %s27 = sphi 0, %s31
      %p28 = scmp.ge.s32.totalorder %s27, 4
      %s37 = sphi 0, %s39
      %s40 = sphi 0, %s37
      %s41 = sphi 0, %s40
      %s57 = sphi 0, %s41
      %s63 = sphi 0, %s65
      %s66 = sphi 0, %s63
      %s67 = sphi 0, %s66
      %s83 = sphi 0, %s67
      %s87 = sphi 0, %s87
      %s89 = sphi 0, %s87
      %s90 = sphi 0, %s89
      %s104 = sphi 0, %s90
      %s108 = sphi 0, %s108
      %s110 = sphi 0, %s108
      %s111 = sphi 0, %s110
      %s125 = sphi 0, %s111
      %s129 = sphi 0, %s129
      %s131 = sphi 0, %s129
      %s132 = sphi 0, %s131
      %s146 = sphi 0, %s132
      %s150 = sphi 0, %s150
      %s152 = sphi 0, %s150
      %s153 = sphi 0, %s152
      %s167 = sphi 0, %s153
      %s171 = sphi 0, %s171
      %s173 = sphi 0, %s171
      %s174 = sphi 0, %s173
      %s188 = sphi 0, %s174
      %s192 = sphi 0, %s192
      %s194 = sphi 0, %s192
      %s195 = sphi 0, %s194
      %s209 = sphi 0, %s195
      %s213 = sphi 0, %s213
      %s215 = sphi 0, %s213
      %s216 = sphi 0, %s215
      %s230 = sphi 0, %s216
      %s234 = sphi 0, %s234
      %s236 = sphi 0, %s234
      %s237 = sphi 0, %s236
      %s251 = sphi 0, %s237
      %s255 = sphi 0, %s255
      %s257 = sphi 0, %s255
      %s258 = sphi 0, %s257
      %s272 = sphi 0, %s258
      %s276 = sphi 0, %s276
      %s278 = sphi 0, %s276
      %s279 = sphi 0, %s278
      %s293 = sphi 0, %s279
      %s297 = sphi 0, %s297
      %s299 = sphi 0, %s297
      %s300 = sphi 0, %s299
      %s314 = sphi 0, %s300
      %s318 = sphi 0, %s318
      %s320 = sphi 0, %s318
      %s321 = sphi 0, %s320
      %s335 = sphi 0, %s321
      %s339 = sphi 0, %s339
      %s341 = sphi 0, %s339
      %s342 = sphi 0, %s341
      %s356 = sphi 0, %s342
      %s360 = sphi 0, %s360
      %s362 = sphi 0, %s360
      %s363 = sphi 0, %s362
      %s377 = sphi 0, %s363
      %s383 = sphi 0, %s385
      %s386 = sphi 0, %s383
      %s387 = sphi 0, %s386
      %s403 = sphi 0, %s387
    $region4: #{tpu_custom_call.1} parent=1 // loop_header_branch
      %30 = sbr.rel (%p28) target = $region8
    $region5: #{tpu_custom_call.1} parent=1 // loop_body
      %s32 = ssub.s32 %s27, 1
      %s33 = ssub.s32 %s27, 2
      %s34 = sadd.s32 %s27, 1
      %s35 = ssub.s32 %s27, %s34
      %p36 = scmp.eq.s32.totalorder %s35, 0
      %s38 = sadd.s32 %s37, 1
      %s39 = scalar_select %p36, %s37, %s38
      %p42 = pneg %p36
      %p43 = scmp.eq.s32.totalorder %s27, 1
      %p44 = por %p42, %p43
      %p45 = scmp.ne.s32.totalorder %s37, %s40
      %p46 = scmp.eq.s32.totalorder %s27, 0
      %p47 = por %p45, %p46
      %p48 = scmp.ne.s32.totalorder %s37, %s40
      %p49 = scmp.eq.s32.totalorder %s32, 1
      %p50 = por %p48, %p49
      %p51 = scmp.ne.s32.totalorder %s40, %s41
      %p52 = scmp.eq.s32.totalorder %s32, 0
      %p53 = por %p51, %p52
      %p54 = scmp.ne.s32.totalorder %s40, %s41
      %p55 = scmp.eq.s32.totalorder %s33, 1
      %p56 = por %p54, %p55
      %p58 = scmp.ne.s32.totalorder %s41, %s57
      %p59 = scmp.eq.s32.totalorder %s33, 0
      %p60 = por %p58, %p59
      %s61 = ssub.s32 %s27, %s34
      %p62 = scmp.eq.s32.totalorder %s61, 0
      %s64 = sadd.s32 %s63, 1
      %s65 = scalar_select %p62, %s63, %s64
      %p68 = pneg %p62
      %p69 = scmp.eq.s32.totalorder %s27, 1
      %p70 = por %p68, %p69
      %p71 = scmp.ne.s32.totalorder %s63, %s66
      %p72 = scmp.eq.s32.totalorder %s27, 0
      %p73 = por %p71, %p72
      %p74 = scmp.ne.s32.totalorder %s63, %s66
      %p75 = scmp.eq.s32.totalorder %s32, 1
      %p76 = por %p74, %p75
      %p77 = scmp.ne.s32.totalorder %s66, %s67
      %p78 = scmp.eq.s32.totalorder %s32, 0
      %p79 = por %p77, %p78
      %p80 = scmp.ne.s32.totalorder %s66, %s67
      %p81 = scmp.eq.s32.totalorder %s33, 1
      %p82 = por %p80, %p81
      %p84 = scmp.ne.s32.totalorder %s67, %s83
      %p85 = scmp.eq.s32.totalorder %s33, 0
      %p86 = por %p84, %p85
      %s88 = sadd.s32 %s87, 1
      %p91 = scmp.eq.s32.totalorder %s27, 1
      %p92 = scmp.ne.s32.totalorder %s87, %s89
      %p93 = scmp.eq.s32.totalorder %s27, 0
      %p94 = por %p92, %p93
      %p95 = scmp.ne.s32.totalorder %s87, %s89
      %p96 = scmp.eq.s32.totalorder %s32, 1
      %p97 = por %p95, %p96
      %p98 = scmp.ne.s32.totalorder %s89, %s90
      %p99 = scmp.eq.s32.totalorder %s32, 0
      %p100 = por %p98, %p99
      %p101 = scmp.ne.s32.totalorder %s89, %s90
      %p102 = scmp.eq.s32.totalorder %s33, 1
      %p103 = por %p101, %p102
      %p105 = scmp.ne.s32.totalorder %s90, %s104
      %p106 = scmp.eq.s32.totalorder %s33, 0
      %p107 = por %p105, %p106
      %s109 = sadd.s32 %s108, 1
      %p112 = scmp.eq.s32.totalorder %s27, 1
      %p113 = scmp.ne.s32.totalorder %s108, %s110
      %p114 = scmp.eq.s32.totalorder %s27, 0
      %p115 = por %p113, %p114
      %p116 = scmp.ne.s32.totalorder %s108, %s110
      %p117 = scmp.eq.s32.totalorder %s32, 1
      %p118 = por %p116, %p117
      %p119 = scmp.ne.s32.totalorder %s110, %s111
      %p120 = scmp.eq.s32.totalorder %s32, 0
      %p121 = por %p119, %p120
      %p122 = scmp.ne.s32.totalorder %s110, %s111
      %p123 = scmp.eq.s32.totalorder %s33, 1
      %p124 = por %p122, %p123
      %p126 = scmp.ne.s32.totalorder %s111, %s125
      %p127 = scmp.eq.s32.totalorder %s33, 0
      %p128 = por %p126, %p127
      %s130 = sadd.s32 %s129, 1
      %p133 = scmp.eq.s32.totalorder %s27, 1
      %p134 = scmp.ne.s32.totalorder %s129, %s131
      %p135 = scmp.eq.s32.totalorder %s27, 0
      %p136 = por %p134, %p135
      %p137 = scmp.ne.s32.totalorder %s129, %s131
      %p138 = scmp.eq.s32.totalorder %s32, 1
      %p139 = por %p137, %p138
      %p140 = scmp.ne.s32.totalorder %s131, %s132
      %p141 = scmp.eq.s32.totalorder %s32, 0
      %p142 = por %p140, %p141
      %p143 = scmp.ne.s32.totalorder %s131, %s132
      %p144 = scmp.eq.s32.totalorder %s33, 1
      %p145 = por %p143, %p144
      %p147 = scmp.ne.s32.totalorder %s132, %s146
      %p148 = scmp.eq.s32.totalorder %s33, 0
      %p149 = por %p147, %p148
      %s151 = sadd.s32 %s150, 1
      %p154 = scmp.eq.s32.totalorder %s27, 1
      %p155 = scmp.ne.s32.totalorder %s150, %s152
      %p156 = scmp.eq.s32.totalorder %s27, 0
      %p157 = por %p155, %p156
      %p158 = scmp.ne.s32.totalorder %s150, %s152
      %p159 = scmp.eq.s32.totalorder %s32, 1
      %p160 = por %p158, %p159
      %p161 = scmp.ne.s32.totalorder %s152, %s153
      %p162 = scmp.eq.s32.totalorder %s32, 0
      %p163 = por %p161, %p162
      %p164 = scmp.ne.s32.totalorder %s152, %s153
      %p165 = scmp.eq.s32.totalorder %s33, 1
      %p166 = por %p164, %p165
      %p168 = scmp.ne.s32.totalorder %s153, %s167
      %p169 = scmp.eq.s32.totalorder %s33, 0
      %p170 = por %p168, %p169
      %s172 = sadd.s32 %s171, 1
      %p175 = scmp.eq.s32.totalorder %s27, 1
      %p176 = scmp.ne.s32.totalorder %s171, %s173
      %p177 = scmp.eq.s32.totalorder %s27, 0
      %p178 = por %p176, %p177
      %p179 = scmp.ne.s32.totalorder %s171, %s173
      %p180 = scmp.eq.s32.totalorder %s32, 1
      %p181 = por %p179, %p180
      %p182 = scmp.ne.s32.totalorder %s173, %s174
      %p183 = scmp.eq.s32.totalorder %s32, 0
      %p184 = por %p182, %p183
      %p185 = scmp.ne.s32.totalorder %s173, %s174
      %p186 = scmp.eq.s32.totalorder %s33, 1
      %p187 = por %p185, %p186
      %p189 = scmp.ne.s32.totalorder %s174, %s188
      %p190 = scmp.eq.s32.totalorder %s33, 0
      %p191 = por %p189, %p190
      %s193 = sadd.s32 %s192, 1
      %p196 = scmp.eq.s32.totalorder %s27, 1
      %p197 = scmp.ne.s32.totalorder %s192, %s194
      %p198 = scmp.eq.s32.totalorder %s27, 0
      %p199 = por %p197, %p198
      %p200 = scmp.ne.s32.totalorder %s192, %s194
      %p201 = scmp.eq.s32.totalorder %s32, 1
      %p202 = por %p200, %p201
      %p203 = scmp.ne.s32.totalorder %s194, %s195
      %p204 = scmp.eq.s32.totalorder %s32, 0
      %p205 = por %p203, %p204
      %p206 = scmp.ne.s32.totalorder %s194, %s195
      %p207 = scmp.eq.s32.totalorder %s33, 1
      %p208 = por %p206, %p207
      %p210 = scmp.ne.s32.totalorder %s195, %s209
      %p211 = scmp.eq.s32.totalorder %s33, 0
      %p212 = por %p210, %p211
      %s214 = sadd.s32 %s213, 1
      %p217 = scmp.eq.s32.totalorder %s27, 1
      %p218 = scmp.ne.s32.totalorder %s213, %s215
      %p219 = scmp.eq.s32.totalorder %s27, 0
      %p220 = por %p218, %p219
      %p221 = scmp.ne.s32.totalorder %s213, %s215
      %p222 = scmp.eq.s32.totalorder %s32, 1
      %p223 = por %p221, %p222
      %p224 = scmp.ne.s32.totalorder %s215, %s216
      %p225 = scmp.eq.s32.totalorder %s32, 0
      %p226 = por %p224, %p225
      %p227 = scmp.ne.s32.totalorder %s215, %s216
      %p228 = scmp.eq.s32.totalorder %s33, 1
      %p229 = por %p227, %p228
      %p231 = scmp.ne.s32.totalorder %s216, %s230
      %p232 = scmp.eq.s32.totalorder %s33, 0
      %p233 = por %p231, %p232
      %s235 = sadd.s32 %s234, 1
      %p238 = scmp.eq.s32.totalorder %s27, 1
      %p239 = scmp.ne.s32.totalorder %s234, %s236
      %p240 = scmp.eq.s32.totalorder %s27, 0
      %p241 = por %p239, %p240
      %p242 = scmp.ne.s32.totalorder %s234, %s236
      %p243 = scmp.eq.s32.totalorder %s32, 1
      %p244 = por %p242, %p243
      %p245 = scmp.ne.s32.totalorder %s236, %s237
      %p246 = scmp.eq.s32.totalorder %s32, 0
      %p247 = por %p245, %p246
      %p248 = scmp.ne.s32.totalorder %s236, %s237
      %p249 = scmp.eq.s32.totalorder %s33, 1
      %p250 = por %p248, %p249
      %p252 = scmp.ne.s32.totalorder %s237, %s251
      %p253 = scmp.eq.s32.totalorder %s33, 0
      %p254 = por %p252, %p253
      %s256 = sadd.s32 %s255, 1
      %p259 = scmp.eq.s32.totalorder %s27, 1
      %p260 = scmp.ne.s32.totalorder %s255, %s257
      %p261 = scmp.eq.s32.totalorder %s27, 0
      %p262 = por %p260, %p261
      %p263 = scmp.ne.s32.totalorder %s255, %s257
      %p264 = scmp.eq.s32.totalorder %s32, 1
      %p265 = por %p263, %p264
      %p266 = scmp.ne.s32.totalorder %s257, %s258
      %p267 = scmp.eq.s32.totalorder %s32, 0
      %p268 = por %p266, %p267
      %p269 = scmp.ne.s32.totalorder %s257, %s258
      %p270 = scmp.eq.s32.totalorder %s33, 1
      %p271 = por %p269, %p270
      %p273 = scmp.ne.s32.totalorder %s258, %s272
      %p274 = scmp.eq.s32.totalorder %s33, 0
      %p275 = por %p273, %p274
      %s277 = sadd.s32 %s276, 1
      %p280 = scmp.eq.s32.totalorder %s27, 1
      %p281 = scmp.ne.s32.totalorder %s276, %s278
      %p282 = scmp.eq.s32.totalorder %s27, 0
      %p283 = por %p281, %p282
      %p284 = scmp.ne.s32.totalorder %s276, %s278
      %p285 = scmp.eq.s32.totalorder %s32, 1
      %p286 = por %p284, %p285
      %p287 = scmp.ne.s32.totalorder %s278, %s279
      %p288 = scmp.eq.s32.totalorder %s32, 0
      %p289 = por %p287, %p288
      %p290 = scmp.ne.s32.totalorder %s278, %s279
      %p291 = scmp.eq.s32.totalorder %s33, 1
      %p292 = por %p290, %p291
      %p294 = scmp.ne.s32.totalorder %s279, %s293
      %p295 = scmp.eq.s32.totalorder %s33, 0
      %p296 = por %p294, %p295
      %s298 = sadd.s32 %s297, 1
      %p301 = scmp.eq.s32.totalorder %s27, 1
      %p302 = scmp.ne.s32.totalorder %s297, %s299
      %p303 = scmp.eq.s32.totalorder %s27, 0
      %p304 = por %p302, %p303
      %p305 = scmp.ne.s32.totalorder %s297, %s299
      %p306 = scmp.eq.s32.totalorder %s32, 1
      %p307 = por %p305, %p306
      %p308 = scmp.ne.s32.totalorder %s299, %s300
      %p309 = scmp.eq.s32.totalorder %s32, 0
      %p310 = por %p308, %p309
      %p311 = scmp.ne.s32.totalorder %s299, %s300
      %p312 = scmp.eq.s32.totalorder %s33, 1
      %p313 = por %p311, %p312
      %p315 = scmp.ne.s32.totalorder %s300, %s314
      %p316 = scmp.eq.s32.totalorder %s33, 0
      %p317 = por %p315, %p316
      %s319 = sadd.s32 %s318, 1
      %p322 = scmp.eq.s32.totalorder %s27, 1
      %p323 = scmp.ne.s32.totalorder %s318, %s320
      %p324 = scmp.eq.s32.totalorder %s27, 0
      %p325 = por %p323, %p324
      %p326 = scmp.ne.s32.totalorder %s318, %s320
      %p327 = scmp.eq.s32.totalorder %s32, 1
      %p328 = por %p326, %p327
      %p329 = scmp.ne.s32.totalorder %s320, %s321
      %p330 = scmp.eq.s32.totalorder %s32, 0
      %p331 = por %p329, %p330
      %p332 = scmp.ne.s32.totalorder %s320, %s321
      %p333 = scmp.eq.s32.totalorder %s33, 1
      %p334 = por %p332, %p333
      %p336 = scmp.ne.s32.totalorder %s321, %s335
      %p337 = scmp.eq.s32.totalorder %s33, 0
      %p338 = por %p336, %p337
      %s340 = sadd.s32 %s339, 1
      %p343 = scmp.eq.s32.totalorder %s27, 1
      %p344 = scmp.ne.s32.totalorder %s339, %s341
      %p345 = scmp.eq.s32.totalorder %s27, 0
      %p346 = por %p344, %p345
      %p347 = scmp.ne.s32.totalorder %s339, %s341
      %p348 = scmp.eq.s32.totalorder %s32, 1
      %p349 = por %p347, %p348
      %p350 = scmp.ne.s32.totalorder %s341, %s342
      %p351 = scmp.eq.s32.totalorder %s32, 0
      %p352 = por %p350, %p351
      %p353 = scmp.ne.s32.totalorder %s341, %s342
      %p354 = scmp.eq.s32.totalorder %s33, 1
      %p355 = por %p353, %p354
      %p357 = scmp.ne.s32.totalorder %s342, %s356
      %p358 = scmp.eq.s32.totalorder %s33, 0
      %p359 = por %p357, %p358
      %s361 = sadd.s32 %s360, 1
      %p364 = scmp.eq.s32.totalorder %s27, 1
      %p365 = scmp.ne.s32.totalorder %s360, %s362
      %p366 = scmp.eq.s32.totalorder %s27, 0
      %p367 = por %p365, %p366
      %p368 = scmp.ne.s32.totalorder %s360, %s362
      %p369 = scmp.eq.s32.totalorder %s32, 1
      %p370 = por %p368, %p369
      %p371 = scmp.ne.s32.totalorder %s362, %s363
      %p372 = scmp.eq.s32.totalorder %s32, 0
      %p373 = por %p371, %p372
      %p374 = scmp.ne.s32.totalorder %s362, %s363
      %p375 = scmp.eq.s32.totalorder %s33, 1
      %p376 = por %p374, %p375
      %p378 = scmp.ne.s32.totalorder %s363, %s377
      %p379 = scmp.eq.s32.totalorder %s33, 0
      %p380 = por %p378, %p379
      %s381 = ssub.s32 %s27, %s34
      %p382 = scmp.eq.s32.totalorder %s381, 0
      %s384 = sadd.s32 %s383, 1
      %s385 = scalar_select %p382, %s383, %s384
      %p388 = pneg %p382
      %p389 = scmp.eq.s32.totalorder %s27, 1
      %p390 = por %p388, %p389
      %p391 = scmp.ne.s32.totalorder %s383, %s386
      %p392 = scmp.eq.s32.totalorder %s27, 0
      %p393 = por %p391, %p392
      %p394 = scmp.ne.s32.totalorder %s383, %s386
      %p395 = scmp.eq.s32.totalorder %s32, 1
      %p396 = por %p394, %p395
      %p397 = scmp.ne.s32.totalorder %s386, %s387
      %p398 = scmp.eq.s32.totalorder %s32, 0
      %p399 = por %p397, %p398
      %p400 = scmp.ne.s32.totalorder %s386, %s387
      %p401 = scmp.eq.s32.totalorder %s33, 1
      %p402 = por %p400, %p401
      %p404 = scmp.ne.s32.totalorder %s387, %s403
      %p405 = scmp.eq.s32.totalorder %s33, 0
      %p406 = por %p404, %p405
      %p407 = scmp.le.s32.totalorder 1, %s27
      %p408 = scmp.lt.s32.totalorder %s27, 3
      %p409 = pnand %p407, %p408
      %p410 = pneg %p409
      // Predicated region
      $region9: #{tpu_custom_call.1} parent=5 // pred_check
        _
      $region10: #{tpu_custom_call.1} parent=5 // pred_check_branch
        %412 = sbr.rel (%p409) target = $region12
      $region11: #{tpu_custom_call.1} parent=5 // pred_region
        %s413 = ssub.s32 %s27, 1
        // Predicated region
        $region13: #{tpu_custom_call.1} parent=11 // pred_check
          %p414 = pneg %p100
        $region14: #{tpu_custom_call.1} parent=11 // pred_check_branch
          %416 = sbr.rel (%p414) target = $region16
        $region15: #{tpu_custom_call.1} parent=11 // pred_region
          _
        $region16: #{tpu_custom_call.1} parent=11 // pred_fallthru
          _
        // Predicated region
        $region17: #{tpu_custom_call.1} parent=11 // pred_check
          %p417 = pneg %p121
        $region18: #{tpu_custom_call.1} parent=11 // pred_check_branch
          %419 = sbr.rel (%p417) target = $region20
        $region19: #{tpu_custom_call.1} parent=11 // pred_region
          _
        $region20: #{tpu_custom_call.1} parent=11 // pred_fallthru
          _
        // Predicated region
        $region21: #{tpu_custom_call.1} parent=11 // pred_check
          %p420 = pneg %p142
        $region22: #{tpu_custom_call.1} parent=11 // pred_check_branch
          %422 = sbr.rel (%p420) target = $region24
        $region23: #{tpu_custom_call.1} parent=11 // pred_region
          _
        $region24: #{tpu_custom_call.1} parent=11 // pred_fallthru
          _
        // Predicated region
        $region25: #{tpu_custom_call.1} parent=11 // pred_check
          %p423 = pneg %p163
        $region26: #{tpu_custom_call.1} parent=11 // pred_check_branch
          %425 = sbr.rel (%p423) target = $region28
        $region27: #{tpu_custom_call.1} parent=11 // pred_region
          _
        $region28: #{tpu_custom_call.1} parent=11 // pred_fallthru
          _
        // Predicated region
        $region29: #{tpu_custom_call.1} parent=11 // pred_check
          %p426 = pneg %p184
        $region30: #{tpu_custom_call.1} parent=11 // pred_check_branch
          %428 = sbr.rel (%p426) target = $region32
        $region31: #{tpu_custom_call.1} parent=11 // pred_region
          _
        $region32: #{tpu_custom_call.1} parent=11 // pred_fallthru
          _
        // Predicated region
        $region33: #{tpu_custom_call.1} parent=11 // pred_check
          %p429 = pneg %p205
        $region34: #{tpu_custom_call.1} parent=11 // pred_check_branch
          %431 = sbr.rel (%p429) target = $region36
        $region35: #{tpu_custom_call.1} parent=11 // pred_region
          _
        $region36: #{tpu_custom_call.1} parent=11 // pred_fallthru
          _
        // Predicated region
        $region37: #{tpu_custom_call.1} parent=11 // pred_check
          %p432 = pneg %p226
        $region38: #{tpu_custom_call.1} parent=11 // pred_check_branch
          %434 = sbr.rel (%p432) target = $region40
        $region39: #{tpu_custom_call.1} parent=11 // pred_region
          _
        $region40: #{tpu_custom_call.1} parent=11 // pred_fallthru
          _
        // Predicated region
        $region41: #{tpu_custom_call.1} parent=11 // pred_check
          %p435 = pneg %p247
        $region42: #{tpu_custom_call.1} parent=11 // pred_check_branch
          %437 = sbr.rel (%p435) target = $region44
        $region43: #{tpu_custom_call.1} parent=11 // pred_region
          _
        $region44: #{tpu_custom_call.1} parent=11 // pred_fallthru
          _
        // Predicated region
        $region45: #{tpu_custom_call.1} parent=11 // pred_check
          %p438 = pneg %p268
        $region46: #{tpu_custom_call.1} parent=11 // pred_check_branch
          %440 = sbr.rel (%p438) target = $region48
        $region47: #{tpu_custom_call.1} parent=11 // pred_region
          %442 = vsyncadd [#allocation3], 0
          %s443 = sshll.u32 %s10, 4
          %s444 = int_to_ptr.hbm [resolvable:$true] %s443
          %s445 = sshll.u32 [#allocation2], 4
          %s446 = int_to_ptr.vmem [resolvable:$true] %s445
          %451 = dma.hbm_to_vmem [thread:$0]  %s444, 256, %s446, [#allocation3], 64, 64, 4
        $region48: #{tpu_custom_call.1} parent=11 // pred_fallthru
          _
        // Predicated region
        $region49: #{tpu_custom_call.1} parent=11 // pred_check
          %p452 = pneg %p289
        $region50: #{tpu_custom_call.1} parent=11 // pred_check_branch
          %454 = sbr.rel (%p452) target = $region52
        $region51: #{tpu_custom_call.1} parent=11 // pred_region
          _
        $region52: #{tpu_custom_call.1} parent=11 // pred_fallthru
          _
        // Predicated region
        $region53: #{tpu_custom_call.1} parent=11 // pred_check
          %p455 = pneg %p310
        $region54: #{tpu_custom_call.1} parent=11 // pred_check_branch
          %457 = sbr.rel (%p455) target = $region56
        $region55: #{tpu_custom_call.1} parent=11 // pred_region
          %459 = vsyncadd [#allocation6], 0
          %s460 = sshll.u32 %s12, 4
          %s461 = int_to_ptr.hbm [resolvable:$true] %s460
          %s462 = sshll.u32 [#allocation5], 4
          %s463 = int_to_ptr.vmem [resolvable:$true] %s462
          %468 = dma.hbm_to_vmem [thread:$0]  %s461, 256, %s463, [#allocation6], 64, 64, 4
        $region56: #{tpu_custom_call.1} parent=11 // pred_fallthru
          _
        // Predicated region
        $region57: #{tpu_custom_call.1} parent=11 // pred_check
          %p469 = pneg %p331
        $region58: #{tpu_custom_call.1} parent=11 // pred_check_branch
          %471 = sbr.rel (%p469) target = $region60
        $region59: #{tpu_custom_call.1} parent=11 // pred_region
          _
        $region60: #{tpu_custom_call.1} parent=11 // pred_fallthru
          _
        // Predicated region
        $region61: #{tpu_custom_call.1} parent=11 // pred_check
          %p472 = pneg %p352
        $region62: #{tpu_custom_call.1} parent=11 // pred_check_branch
          %474 = sbr.rel (%p472) target = $region64
        $region63: #{tpu_custom_call.1} parent=11 // pred_region
          _
        $region64: #{tpu_custom_call.1} parent=11 // pred_fallthru
          _
        // Predicated region
        $region65: #{tpu_custom_call.1} parent=11 // pred_check
          %p475 = pneg %p373
        $region66: #{tpu_custom_call.1} parent=11 // pred_check_branch
          %477 = sbr.rel (%p475) target = $region68
        $region67: #{tpu_custom_call.1} parent=11 // pred_region
          _
        $region68: #{tpu_custom_call.1} parent=11 // pred_fallthru
          _
      $region12: #{tpu_custom_call.1} parent=5 // pred_fallthru
        _
      %p478 = scmp.lt.s32.totalorder %s27, 2
      // Predicated region
      $region69: #{tpu_custom_call.1} parent=5 // pred_check
        %p479 = pneg %p478
      $region70: #{tpu_custom_call.1} parent=5 // pred_check_branch
        %481 = sbr.rel (%p479) target = $region72
      $region71: #{tpu_custom_call.1} parent=5 // pred_region
        // Predicated region
        $region73: #{tpu_custom_call.1} parent=71 // pred_check
          %p482 = pneg %p47
        $region74: #{tpu_custom_call.1} parent=71 // pred_check_branch
          %484 = sbr.rel (%p482) target = $region76
        $region75: #{tpu_custom_call.1} parent=71 // pred_region
          %p485 = scmp.lt.s32.totalorder %s27, 1
          %s486 = scalar_select %p485, %s27, 1
          %s487 = smul.addr %s486, 8
          %s488 = scalar_lea.vmem %s0, %s487
        $region76: #{tpu_custom_call.1} parent=71 // pred_fallthru
          _
        // Predicated region
        $region77: #{tpu_custom_call.1} parent=71 // pred_check
          %p489 = pneg %p73
        $region78: #{tpu_custom_call.1} parent=71 // pred_check_branch
          %491 = sbr.rel (%p489) target = $region80
        $region79: #{tpu_custom_call.1} parent=71 // pred_region
          %p492 = scmp.lt.s32.totalorder %s27, 1
          %s493 = scalar_select %p492, %s27, 1
          %s494 = smul.addr %s493, 8
          %s495 = scalar_lea.vmem %s1, %s494
        $region80: #{tpu_custom_call.1} parent=71 // pred_fallthru
          _
      $region72: #{tpu_custom_call.1} parent=5 // pred_fallthru
        _
      %p496 = scmp.le.s32.totalorder 1, %s27
      %p497 = scmp.lt.s32.totalorder %s27, 3
      %p498 = pnand %p496, %p497
      %p499 = pneg %p498
      // Predicated region
      $region81: #{tpu_custom_call.1} parent=5 // pred_check
        _
      $region82: #{tpu_custom_call.1} parent=5 // pred_check_branch
        %501 = sbr.rel (%p498) target = $region84
      $region83: #{tpu_custom_call.1} parent=5 // pred_region
        %s502 = ssub.s32 %s27, 1
        // Predicated region
        $region85: #{tpu_custom_call.1} parent=83 // pred_check
          %p503 = pneg %p268
        $region86: #{tpu_custom_call.1} parent=83 // pred_check_branch
          %505 = sbr.rel (%p503) target = $region88
        $region87: #{tpu_custom_call.1} parent=83 // pred_region
          %507 = dma.done [#allocation3], 256
        $region88: #{tpu_custom_call.1} parent=83 // pred_fallthru
          _
        // Predicated region
        $region89: #{tpu_custom_call.1} parent=83 // pred_check
          %p508 = pneg %p310
        $region90: #{tpu_custom_call.1} parent=83 // pred_check_branch
          %510 = sbr.rel (%p508) target = $region92
        $region91: #{tpu_custom_call.1} parent=83 // pred_region
          %512 = dma.done [#allocation6], 256
        $region92: #{tpu_custom_call.1} parent=83 // pred_fallthru
          _
        %p513 = scmp.lt.s32.totalorder %s32, 1
        %s514 = scalar_select %p513, %s32, 1
        %s515 = smul.addr %s514, 8
        %s516 = scalar_lea.vmem %s0, %s515
        %p517 = pneg %p53
        %p518 = pneg %p50
        %p519 = scmp.lt.s32.totalorder %s32, 1
        %s520 = scalar_select %p519, %s32, 1
        %s521 = smul.addr %s520, 8
        %s522 = scalar_lea.vmem %s1, %s521
        %p523 = pneg %p79
        %p524 = pneg %p76
        %p525 = pneg %p100
        %p526 = pneg %p97
        %p527 = pneg %p121
        %p528 = pneg %p118
        %p529 = pneg %p142
        %p530 = pneg %p139
        %p531 = pneg %p163
        %p532 = pneg %p160
        %p533 = pneg %p184
        %p534 = pneg %p181
        %p535 = pneg %p205
        %p536 = pneg %p202
        %p537 = pneg %p226
        %p538 = pneg %p223
        %p539 = pneg %p247
        %p540 = pneg %p244
        %p541 = pneg %p268
        %p542 = pneg %p265
        %p543 = pneg %p289
        %p544 = pneg %p286
        %p545 = pneg %p310
        %p546 = pneg %p307
        %p547 = pneg %p331
        %p548 = pneg %p328
        %p549 = pneg %p352
        %p550 = pneg %p349
        %p551 = pneg %p373
        %p552 = pneg %p370
        %p553 = pneg %p399
        %p554 = pneg %p396
        %s555 = sand.u32 %s386, 1
        %s556 = scalar_lea.sflag [#allocation4], %s555
        %s557 = sand.u32 %s386, 1
        %s558 = smul.addr %s557, 8
        %s559 = scalar_lea.vmem [#allocation7], %s558
        %p560 = scmp.lt.s32.totalorder %s32, 1
        %s561 = scalar_select %p560, %s32, 1
        %s562 = smul.addr %s561, 8
        %s563 = scalar_lea.vmem %s0, %s562
        %p564 = scmp.lt.s32.totalorder %s32, 1
        %s565 = scalar_select %p564, %s32, 1
        %s566 = smul.addr %s565, 8
        %s567 = scalar_lea.vmem %s1, %s566
        %v569 = vld [vmem:[%s563] sm:$0xff]
        %v570 = vld [vmem:[%s2] sm:$0xf]
        %v571 = vld [vmem:[%s2 + $0x4] sm:$0xf]
        %v572 = vld [vmem:[%s2 + $0x8] sm:$0xf]
        %v573 = vld [vmem:[%s2 + $0xc] sm:$0xf]
        %v574 = vpack.c.bf16 %v569, %v569
        %v575 = vld [vmem:[%s3] sm:$0x1]
        %v577 = vperm.slane %v575, 0
        %v583 = vunpack.c.l.b16 %v570
        %v584 = vunpack.c.l.b16 %v571
        %v585 = vunpack.c.l.b16 %v572
        %v586 = vunpack.c.l.b16 %v573
        %v587 = vpack.c.b16 %v584, %v583
        %v588 = vpack.c.b16 %v586, %v585
        %vm591 = vcmask 261120
        %v593 = vsel %vm591, %v574, 0
        %595 = vmatpush.bf16.msra.mxu0 0
        %596 = vmatpush.bf16.msra.mxu0 0
        %597 = vmatpush.bf16.msra.mxu0 0
        %598 = vmatpush.bf16.msra.mxu0 0
        %599 = vmatpush.bf16.msra.mxu0 0
        %600 = vmatpush.bf16.msra.mxu0 0
        %601 = vmatpush.bf16.msra.mxu0 %v588
        %602 = vmatpush.bf16.msra.mxu0 %v587
        %603 = vmatmul.bf16.gmra.mxu0 %v593
        %v604 = vpop.f32.mrf.mxu0
        %v605 = vadd.f32 %v577, %v604
        %v606 = vpop.f32.mrf.mxu0
        %607 = vdwg.mxu0
        %v608 = vmax.f32 %v605, 0.0
        %v609 = vld [vmem:[%s4] sm:$0xf]
        %v610 = vld [vmem:[%s4 + $0x4] sm:$0xf]
        %v611 = vld [vmem:[%s4 + $0x8] sm:$0xf]
        %v612 = vld [vmem:[%s4 + $0xc] sm:$0xf]
        %v613 = vpack.c.bf16 %v608, %v608
        %v614 = vld [vmem:[%s5] sm:$0x1]
        %v616 = vperm.slane %v614, 0
        %v622 = vunpack.c.l.b16 %v609
        %v623 = vunpack.c.l.b16 %v610
        %v624 = vunpack.c.l.b16 %v611
        %v625 = vunpack.c.l.b16 %v612
        %v626 = vpack.c.b16 %v623, %v622
        %v627 = vpack.c.b16 %v625, %v624
        %v631 = vsel %vm591, %v613, 0
        %633 = vmatpush.bf16.msra.mxu0 0
        %634 = vmatpush.bf16.msra.mxu0 0
        %635 = vmatpush.bf16.msra.mxu0 0
        %636 = vmatpush.bf16.msra.mxu0 0
        %637 = vmatpush.bf16.msra.mxu0 0
        %638 = vmatpush.bf16.msra.mxu0 0
        %639 = vmatpush.bf16.msra.mxu0 %v627
        %640 = vmatpush.bf16.msra.mxu0 %v626
        %641 = vmatmul.bf16.gmra.mxu0 %v631
        %v642 = vpop.f32.mrf.mxu0
        %v643 = vadd.f32 %v616, %v642
        %v644 = vpop.f32.mrf.mxu0
        %645 = vdwg.mxu0
        %v646 = vmax.f32 %v643, 0.0
        %v647 = vld [vmem:[%s6] sm:$0xf]
        %v648 = vld [vmem:[%s6 + $0x4] sm:$0xf]
        %v649 = vld [vmem:[%s6 + $0x8] sm:$0xf]
        %v650 = vld [vmem:[%s6 + $0xc] sm:$0xf]
        %v651 = vpack.c.bf16 %v646, %v646
        %v652 = vld [vmem:[%s7] sm:$0x1]
        %v654 = vperm.slane %v652, 0
        %v660 = vunpack.c.l.b16 %v647
        %v661 = vunpack.c.l.b16 %v648
        %v662 = vunpack.c.l.b16 %v649
        %v663 = vunpack.c.l.b16 %v650
        %v664 = vpack.c.b16 %v661, %v660
        %v665 = vpack.c.b16 %v663, %v662
        %v669 = vsel %vm591, %v651, 0
        %671 = vmatpush.bf16.msra.mxu0 0
        %672 = vmatpush.bf16.msra.mxu0 0
        %673 = vmatpush.bf16.msra.mxu0 0
        %674 = vmatpush.bf16.msra.mxu0 0
        %675 = vmatpush.bf16.msra.mxu0 0
        %676 = vmatpush.bf16.msra.mxu0 0
        %677 = vmatpush.bf16.msra.mxu0 %v665
        %678 = vmatpush.bf16.msra.mxu0 %v664
        %679 = vmatmul.bf16.gmra.mxu0 %v669
        %v680 = vpop.f32.mrf.mxu0
        %v681 = vadd.f32 %v654, %v680
        %v682 = vpop.f32.mrf.mxu0
        %683 = vdwg.mxu0
        %v684 = vld [vmem:[%s567] sm:$0xff]
        %v685 = vld [vmem:[%s8] sm:$0x3]
        %687 = vset.pattern.permute.xlu0 0
        %688 = vperm.xlu0 %687, %v684
        %v689 = vpop.permute.xlu0 %688
        %v691 = vperm.slane %v685, 0
        %v692 = vmul.f32 %v689, %v691
        %v693 = vadd.f32 %v646, %v692
        %694 = vset.pattern.permute.xlu0 1
        %695 = vperm.xlu0 %694, %v684
        %v696 = vpop.permute.xlu0 %695
        %v698 = vperm.slane %v685, 1
        %v699 = vmul.f32 %v696, %v698
        %v700 = vadd.f32 %v693, %v699
        %v701 = vld [vmem:[%s9] sm:$0x1]
        %v703 = vperm.slane %v701, 0
        %v705 = vadd.f32 %v700, %v703
        %v706 = vld [vmem:[#allocation2] sm:$0xf]
        %v707 = vld [vmem:[#allocation2 + $0x4] sm:$0xf]
        %v708 = vld [vmem:[#allocation2 + $0x8] sm:$0xf]
        %v709 = vld [vmem:[#allocation2 + $0xc] sm:$0xf]
        %v710 = vpack.c.bf16 %v705, %v705
        %v711 = vld [vmem:[%s11] sm:$0x1]
        %v713 = vperm.slane %v711, 0
        %v719 = vunpack.c.l.b16 %v706
        %v720 = vunpack.c.l.b16 %v707
        %v721 = vunpack.c.l.b16 %v708
        %v722 = vunpack.c.l.b16 %v709
        %v723 = vpack.c.b16 %v720, %v719
        %v724 = vpack.c.b16 %v722, %v721
        %v728 = vsel %vm591, %v710, 0
        %730 = vmatpush.bf16.msra.mxu0 0
        %731 = vmatpush.bf16.msra.mxu0 0
        %732 = vmatpush.bf16.msra.mxu0 0
        %733 = vmatpush.bf16.msra.mxu0 0
        %734 = vmatpush.bf16.msra.mxu0 0
        %735 = vmatpush.bf16.msra.mxu0 0
        %736 = vmatpush.bf16.msra.mxu0 %v724
        %737 = vmatpush.bf16.msra.mxu0 %v723
        %738 = vmatmul.bf16.gmra.mxu0 %v728
        %v739 = vpop.f32.mrf.mxu0
        %v740 = vadd.f32 %v713, %v739
        %v741 = vpop.f32.mrf.mxu0
        %742 = vdwg.mxu0
        %v743 = vmax.f32 %v740, 0.0
        %v744 = vld [vmem:[#allocation5] sm:$0xf]
        %v745 = vld [vmem:[#allocation5 + $0x4] sm:$0xf]
        %v746 = vld [vmem:[#allocation5 + $0x8] sm:$0xf]
        %v747 = vld [vmem:[#allocation5 + $0xc] sm:$0xf]
        %v748 = vpack.c.bf16 %v743, %v743
        %v749 = vld [vmem:[%s13] sm:$0x1]
        %v751 = vperm.slane %v749, 0
        %v757 = vunpack.c.l.b16 %v744
        %v758 = vunpack.c.l.b16 %v745
        %v759 = vunpack.c.l.b16 %v746
        %v760 = vunpack.c.l.b16 %v747
        %v761 = vpack.c.b16 %v758, %v757
        %v762 = vpack.c.b16 %v760, %v759
        %v766 = vsel %vm591, %v748, 0
        %768 = vmatpush.bf16.msra.mxu0 0
        %769 = vmatpush.bf16.msra.mxu0 0
        %770 = vmatpush.bf16.msra.mxu0 0
        %771 = vmatpush.bf16.msra.mxu0 0
        %772 = vmatpush.bf16.msra.mxu0 0
        %773 = vmatpush.bf16.msra.mxu0 0
        %774 = vmatpush.bf16.msra.mxu0 %v762
        %775 = vmatpush.bf16.msra.mxu0 %v761
        %776 = vmatmul.bf16.gmra.mxu0 %v766
        %v777 = vpop.f32.mrf.mxu0
        %v778 = vadd.f32 %v751, %v777
        %v779 = vpop.f32.mrf.mxu0
        %780 = vdwg.mxu0
        %v781 = vmax.f32 %v778, 0.0
        %v782 = vld [vmem:[%s14] sm:$0xf]
        %v783 = vld [vmem:[%s14 + $0x4] sm:$0xf]
        %v784 = vld [vmem:[%s14 + $0x8] sm:$0xf]
        %v785 = vld [vmem:[%s14 + $0xc] sm:$0xf]
        %v786 = vpack.c.bf16 %v781, %v781
        %v787 = vld [vmem:[%s15] sm:$0x1]
        %v789 = vperm.slane %v787, 0
        %v795 = vunpack.c.l.b16 %v782
        %v796 = vunpack.c.l.b16 %v783
        %v797 = vunpack.c.l.b16 %v784
        %v798 = vunpack.c.l.b16 %v785
        %v799 = vpack.c.b16 %v796, %v795
        %v800 = vpack.c.b16 %v798, %v797
        %v804 = vsel %vm591, %v786, 0
        %806 = vmatpush.bf16.msra.mxu0 0
        %807 = vmatpush.bf16.msra.mxu0 0
        %808 = vmatpush.bf16.msra.mxu0 0
        %809 = vmatpush.bf16.msra.mxu0 0
        %810 = vmatpush.bf16.msra.mxu0 0
        %811 = vmatpush.bf16.msra.mxu0 0
        %812 = vmatpush.bf16.msra.mxu0 %v800
        %813 = vmatpush.bf16.msra.mxu0 %v799
        %814 = vmatmul.bf16.gmra.mxu0 %v804
        %v815 = vpop.f32.mrf.mxu0
        %v816 = vadd.f32 %v789, %v815
        %v817 = vpop.f32.mrf.mxu0
        %818 = vdwg.mxu0
        %820 = vrot.lane.b32.xlu0 %v816, 16
        %v821 = vpop.permute.xlu0 %820
        %824 = vrot.lane.b32.xlu0 %v681, 32
        %v825 = vpop.permute.xlu0 %824
        %vm827 = vcmask 130048
        %v828 = vsel %vm827, %v816, %v821
        %v829 = vsel %vm591, %v828, %v825
        %vm830 = vcmask 277504
        %831 = vst.msk [vmem:[%s559] sm:$0xff] %vm830, %v829
        %s832 = sand.u32 %s386, 1
        %s833 = scalar_lea.sflag [#allocation4], %s832
        %s834 = sand.u32 %s386, 1
        %s835 = smul.addr %s834, 8
        %s836 = scalar_lea.vmem [#allocation7], %s835
        // Predicated region
        $region93: #{tpu_custom_call.1} parent=83 // pred_check
          %p837 = pneg %p396
        $region94: #{tpu_custom_call.1} parent=83 // pred_check_branch
          %839 = sbr.rel (%p837) target = $region96
        $region95: #{tpu_custom_call.1} parent=83 // pred_region
          %841 = vsyncadd %s833, 0
          %s842 = smul.addr %s32, 8
          %s843 = scalar_lea.hbm %s16, %s842
          %s845 = sshll.u32 %s836, 4
          %s846 = int_to_ptr.vmem [resolvable:$true] %s845
          %s847 = sshll.u32 %s843, 4
          %s848 = int_to_ptr.hbm [resolvable:$true] %s847
          %850 = dma.vmem_to_hbm [thread:$0]  %s846, 128, %s848, %s833
        $region96: #{tpu_custom_call.1} parent=83 // pred_fallthru
          _
      $region84: #{tpu_custom_call.1} parent=5 // pred_fallthru
        _
      %p851 = scmp.le.s32.totalorder 2, %s27
      // Predicated region
      $region97: #{tpu_custom_call.1} parent=5 // pred_check
        %p852 = pneg %p851
      $region98: #{tpu_custom_call.1} parent=5 // pred_check_branch
        %854 = sbr.rel (%p852) target = $region100
      $region99: #{tpu_custom_call.1} parent=5 // pred_region
        %s855 = ssub.s32 %s27, 2
        // Predicated region
        $region101: #{tpu_custom_call.1} parent=99 // pred_check
          %p856 = pneg %p402
        $region102: #{tpu_custom_call.1} parent=99 // pred_check_branch
          %858 = sbr.rel (%p856) target = $region104
        $region103: #{tpu_custom_call.1} parent=99 // pred_region
          %s859 = sand.u32 %s387, 1
          %s860 = scalar_lea.sflag [#allocation4], %s859
          %s861 = sand.u32 %s387, 1
          %s862 = smul.addr %s861, 8
          %s863 = scalar_lea.vmem [#allocation7], %s862
          %865 = dma.done %s860, 128
        $region104: #{tpu_custom_call.1} parent=99 // pred_fallthru
          _
      $region100: #{tpu_custom_call.1} parent=5 // pred_fallthru
        _
    $region6: #{tpu_custom_call.1} parent=1 // loop_footer
      %s31 = sadd.s32 1, %s27
    $region7: #{tpu_custom_call.1} parent=1 // loop_footer_branch
      %26 = sbr.rel target = $region3
    $region8: #{tpu_custom_call.1} parent=1 // loop_exit
      _
    %866 = vsyncpa [#allocation3], 1
    %s867 = scalar_lea.sflag [#allocation3], 1
    %868 = vsyncpa %s867, 1
    %869 = vsyncpa [#allocation6], 1
    %870 = vsyncpa [#allocation4], 1
    %s871 = scalar_lea.sflag [#allocation4], 1
    %872 = vsyncpa %s871, 1

</llo_original>
